<compile_context>
chip_gen: v6e
topology: v6e:2x2x1
jax: 0.10.0
libtpu: 0.0.40
codegen_flags: <defaults>
</compile_context>

<pallas_src>
import jax
import jax.numpy as jnp
from jax.experimental import pallas as pl
from jax.experimental.pallas import tpu as pltpu


# ----------------------------------------------------------------------------
# Kernel: elementwise ReLU6(x + 3) * (1/6) on a lane-dense 2-D tile
# ----------------------------------------------------------------------------
def _h_sigmoid_kernel(x_ref, o_ref):
    x = x_ref[...].astype(jnp.float32)
    y = jnp.minimum(jnp.maximum(x + 3.0, 0.0), 6.0) * (1.0 / 6.0)
    o_ref[...] = y.astype(o_ref.dtype)


def _round_up(a, b):
    return ((a + b - 1) // b) * b


def h_sigmoid(x, *, out_dtype=None, target_block_bytes=4 * 1024 * 1024):
    """ReLU6(x + 3) / 6, elementwise. Shape preserved; dtype preserved unless
    out_dtype is given."""
    orig_shape = x.shape
    in_dtype = jnp.dtype(x.dtype)
    out_dt = jnp.dtype(out_dtype) if out_dtype is not None else in_dtype
    n = x.size

    if n == 0:
        return x.astype(out_dt)

    in_isz = in_dtype.itemsize
    out_isz = out_dt.itemsize
    max_isz = max(in_isz, out_isz)
    min_isz = min(in_isz, out_isz)
    # native sublane multiple of the narrowest dtype involved (8/16/32)
    sub = max(8, 32 // min_isz)

    # ---- choose a lane-dense 2-D layout (no padding on the common path) ----
    flat = x.reshape(-1)
    padded = False
    if n % 128 == 0:
        m = n // 128
        d = 1
        for cand in range(16, 0, -1):        # cols up to 2048, exact divisor of n
            if m % cand == 0:
                d = cand
                break
        cols = 128 * d
    else:
        # fallback: minimal tail pad to a multiple of cols, sliced off at the end
        cols = 512 if n >= 512 else 128
        pad_to = _round_up(n, cols)
        flat = jnp.pad(flat, (0, pad_to - n))
        padded = True

    rows = flat.size // cols

    # ---- block size: ~target_block_bytes per operand, sublane-aligned ------
    bytes_per_row = cols * max_isz
    target_rows = max(sub, (target_block_bytes // bytes_per_row) // sub * sub)

    if rows >= 2 * sub:
        # guarantee >= 2 grid steps (v7x megacore sharding); boundary block is
        # ragged and masked by Pallas, no row padding needed.
        block_rows = min(target_rows, _round_up(pl.cdiv(rows, 2), sub))
    else:
        block_rows = rows  # full (small) row extent; full-dim blocks are legal
    grid_steps = pl.cdiv(rows, block_rows)

    x2d = flat.reshape(rows, cols)

    out2d = pl.pallas_call(
        _h_sigmoid_kernel,
        out_shape=jax.ShapeDtypeStruct((rows, cols), out_dt),
        grid_spec=pltpu.PrefetchScalarGridSpec(
            num_scalar_prefetch=0,
            grid=(grid_steps,),
            in_specs=[pl.BlockSpec((block_rows, cols), lambda i: (i, 0))],
            out_specs=pl.BlockSpec((block_rows, cols), lambda i: (i, 0)),
        ),
        compiler_params=pltpu.CompilerParams(
            dimension_semantics=("parallel",),
            # double-buffered in+out at 4 MiB blocks ~= 16 MiB; raise above the
            # v5e 16 MiB scoped default, well under every chip's physical VMEM.
            vmem_limit_bytes=32 * 1024 * 1024,
        ),
    )(x2d)

    if padded:
        return out2d.reshape(-1)[:n].reshape(orig_shape)
    return out2d.reshape(orig_shape)


# ----------------------------------------------------------------------------
# Pure-JAX reference
# ----------------------------------------------------------------------------
def h_sigmoid_reference(x):
    xf = x.astype(jnp.float32)
    return (jnp.minimum(jnp.maximum(xf + 3.0, 0.0), 6.0) * (1.0 / 6.0)).astype(x.dtype)


if __name__ == "__main__":
    key = jax.random.PRNGKey(0)

    # 1) module-typical shape, f32 (exact-divisor / no-pad path, single block)
    B, C, H, W = 2, 4, 16, 16
    x1 = 4.0 * jax.random.normal(jax.random.fold_in(key, 1), (B, C, H, W), jnp.float32)
    o1 = jax.block_until_ready(h_sigmoid(x1))
    r1 = jax.block_until_ready(h_sigmoid_reference(x1))
    assert o1.shape == x1.shape and o1.dtype == x1.dtype
    assert jnp.allclose(o1, r1, atol=1e-6, rtol=1e-6), float(jnp.max(jnp.abs(o1 - r1)))

    # 2) larger f32 tensor: multi-step grid with ragged-safe blocking
    x2 = 4.0 * jax.random.normal(jax.random.fold_in(key, 2), (8, 8, 32, 32), jnp.float32)
    o2 = jax.block_until_ready(h_sigmoid(x2))
    r2 = jax.block_until_ready(h_sigmoid_reference(x2))
    assert jnp.allclose(o2, r2, atol=1e-6, rtol=1e-6)

    # 3) bf16 input, dtype preserved (16-row sublane multiple path)
    x3 = (4.0 * jax.random.normal(jax.random.fold_in(key, 3), (2, 8, 16, 16),
                                  jnp.float32)).astype(jnp.bfloat16)
    o3 = jax.block_until_ready(h_sigmoid(x3))
    r3 = jax.block_until_ready(h_sigmoid_reference(x3))
    assert o3.dtype == jnp.bfloat16
    assert jnp.allclose(o3.astype(jnp.float32), r3.astype(jnp.float32), atol=1e-2)

    # 4) odd size, not a multiple of 128 (pad fallback path)
    x4 = 4.0 * jax.random.normal(jax.random.fold_in(key, 4), (3, 5, 7), jnp.float32)
    o4 = jax.block_until_ready(h_sigmoid(x4))
    r4 = jax.block_until_ready(h_sigmoid_reference(x4))
    assert o4.shape == x4.shape
    assert jnp.allclose(o4, r4, atol=1e-6, rtol=1e-6)

    print("KERNEL_OK")
</pallas_src>

<mosaic_0001>
module attributes {stable_mosaic.version = 11 : i64} {
  func.func @_h_sigmoid_kernel(%arg0: i32, %arg1: memref<1x2048xf32, #tpu.memory_space<vmem>>, %arg2: memref<1x2048xf32, #tpu.memory_space<vmem>>) attributes {dimension_semantics = [#tpu.dimension_semantics<parallel>], iteration_bounds = array<i64: 1>, scalar_prefetch = 0 : i64, scratch_operands = 0 : i64, tpu.core_type = #tpu.core_type<tc>, window_params = [{transform_indices = @transform_0, window_bounds = array<i64: 1, 2048>}, {transform_indices = @transform_1, window_bounds = array<i64: 1, 2048>}]} {
    %c0 = arith.constant 0 : index
    %c0_0 = arith.constant 0 : index
    %0 = vector.load %arg1[%c0, %c0_0] : memref<1x2048xf32, #tpu.memory_space<vmem>>, vector<1x2048xf32>
    %cst = arith.constant 3.000000e+00 : f32
    %1 = vector.broadcast %cst : f32 to vector<1x2048xf32>
    %2 = arith.addf %0, %1 : vector<1x2048xf32>
    %cst_1 = arith.constant 0.000000e+00 : f32
    %3 = vector.broadcast %cst_1 : f32 to vector<1x2048xf32>
    %4 = arith.maximumf %2, %3 : vector<1x2048xf32>
    %cst_2 = arith.constant 6.000000e+00 : f32
    %5 = vector.broadcast %cst_2 : f32 to vector<1x2048xf32>
    %6 = arith.minimumf %4, %5 : vector<1x2048xf32>
    %cst_3 = arith.constant 0.166666672 : f32
    %7 = vector.broadcast %cst_3 : f32 to vector<1x2048xf32>
    %8 = arith.mulf %6, %7 : vector<1x2048xf32>
    %c0_4 = arith.constant 0 : index
    %c0_5 = arith.constant 0 : index
    %9 = vector.load %arg2[%c0_4, %c0_5] : memref<1x2048xf32, #tpu.memory_space<vmem>>, vector<1x2048xf32>
    tpu.vector_store %arg2[%c0_4, %c0_5], %8 {strides = array<i32>} : memref<1x2048xf32, #tpu.memory_space<vmem>>, vector<1x2048xf32>,
    return
  }
  func.func @transform_0(%arg0: i32) -> (i32, i32) {
    %c0_i32 = arith.constant 0 : i32
    %c0_i32_0 = arith.constant 0 : i32
    return %arg0, %c0_i32 : i32, i32
  }
  func.func @transform_1(%arg0: i32) -> (i32, i32) {
    %c0_i32 = arith.constant 0 : i32
    %c0_i32_0 = arith.constant 0 : i32
    return %arg0, %c0_i32 : i32, i32
  }
}

</mosaic_0001>

<llo_original>
// kernel: tpu_custom_call.1
$region0: #{tpu_custom_call.1}
  #allocation0 [shape = 'u32[]', space=smem, size = 0x4, offset = 0x4, fixed_abs, tag = 'smem constant byte address 0x4 - core index']
  #allocation1 [shape = 'u32[144,128]{1,0:T(1,128)}', space=vmem, size = 0x12000, scoped, tag = 'internal scratch']
  %s0 = inlined_call_operand.hbm [shape: f32[1,2048], index: 0, kind: input, shape index: {}]
  %s1 = inlined_call_operand.hbm [shape: f32[1,2048], index: 1, kind: output, shape index: {}]
  %s2 = sld [smem:[#allocation0]]
  $region18: #{tpu_custom_call.1} parent=0
    _
  %s4 = ssub.s32 1, %s2
  %s5 = scalar_select 0, %s4, %s2
  $region1: #{tpu_custom_call.1} parent=0
    #allocation2 [shape = 'u8[8192]{0}', space=vmem, size = 0x2000, scoped, tag = 'input window, operand 0, single buffered']
    #allocation3 [shape = 's32[1]{0}', space=sflag, size = 0x4, scoped, tag = 'scoped memory for tpu_custom_call.1']
    #allocation4 [shape = 's32[1]{0}', space=sflag, size = 0x4, scoped, tag = 'scoped memory for tpu_custom_call.1']
    #allocation5 [shape = 'u8[8192]{0}', space=vmem, size = 0x2000, scoped, tag = 'output window, operand 0, single buffered']
    %6 = vsyncpa [#allocation3], 0
    %7 = vsyncpa [#allocation4], 0
    // Predicated region
    $region2: #{tpu_custom_call.1} parent=1 // pred_check
      _
    $region3: #{tpu_custom_call.1} parent=1 // pred_check_branch
      %9 = sbr.rel (0) target = $region5
    $region4: #{tpu_custom_call.1} parent=1 // pred_region
      %s11 = ssub.s32 256, 256
      %12 = vsyncadd [#allocation3], %s11
      %s14 = sshll.u32 [#allocation2], 4
      %s15 = int_to_ptr.vmem [resolvable:$true] %s14
      %17 = dma.hbm_to_vmem [thread:$0]  %s0, 256, %s15, [#allocation3]
    $region5: #{tpu_custom_call.1} parent=1 // pred_fallthru
      _
    // Predicated region
    $region6: #{tpu_custom_call.1} parent=1 // pred_check
      _
    $region7: #{tpu_custom_call.1} parent=1 // pred_check_branch
      %19 = sbr.rel (0) target = $region9
    $region8: #{tpu_custom_call.1} parent=1 // pred_region
      %20 = dma.done [#allocation3], 256
    $region9: #{tpu_custom_call.1} parent=1 // pred_fallthru
      _
    %v21 = vld [vmem:[#allocation2] sm:$0xff]
    %v22 = vld [vmem:[#allocation2 + $0x8] sm:$0xff]
    %v23 = vadd.f32 %v21, 3.0
    %v24 = vadd.f32 %v22, 3.0
    %v25 = vmax.f32 %v23, 0.0
    %v26 = vmax.f32 %v24, 0.0
    %v27 = vmin.f32 %v25, 6.0
    %v28 = vmin.f32 %v26, 6.0
    %v29 = vmul.f32 %v27, 0.16666667
    %v30 = vmul.f32 %v28, 0.16666667
    %31 = vst [vmem:[#allocation5] sm:$0xff] %v29
    %32 = vst [vmem:[#allocation5 + $0x8] sm:$0xff] %v30
    // Predicated region
    $region10: #{tpu_custom_call.1} parent=1 // pred_check
      _
    $region11: #{tpu_custom_call.1} parent=1 // pred_check_branch
      %34 = sbr.rel (0) target = $region13
    $region12: #{tpu_custom_call.1} parent=1 // pred_region
      %s36 = ssub.s32 256, 256
      %37 = vsyncadd [#allocation4], %s36
      %s39 = sshll.u32 [#allocation5], 4
      %s40 = int_to_ptr.vmem [resolvable:$true] %s39
      %42 = dma.vmem_to_hbm [thread:$0]  %s40, 256, %s1, [#allocation4]
    $region13: #{tpu_custom_call.1} parent=1 // pred_fallthru
      _
    // Predicated region
    $region14: #{tpu_custom_call.1} parent=1 // pred_check
      _
    $region15: #{tpu_custom_call.1} parent=1 // pred_check_branch
      %44 = sbr.rel (0) target = $region17
    $region16: #{tpu_custom_call.1} parent=1 // pred_region
      %45 = dma.done [#allocation4], 256
    $region17: #{tpu_custom_call.1} parent=1 // pred_fallthru
      _
    %46 = vsyncpa [#allocation3], 1
    %47 = vsyncpa [#allocation4], 1

</llo_original>
